<compile_context>
chip_gen: v6e
topology: v6e:2x2x1
jax: 0.10.0
libtpu: 0.0.40
codegen_flags: <defaults>
</compile_context>

<pallas_src>
import numpy as np
import jax
import jax.numpy as jnp
from jax.experimental import pallas as pl
from jax.experimental.pallas import tpu as pltpu

# ----------------------- static configuration -----------------------
B = 2
C_IN = 3
H_IN, W_IN = 8, 12            # raw input image size (H, W)
BASE = 16                     # base_size (preprocessor resizes to BASE x BASE)
INPUT_SIZE = (16, 8)          # (W, H), as in the PyTorch module
H_OUT, W_OUT = INPUT_SIZE[1], INPUT_SIZE[0]
C_MID = 8                     # synthetic backbone hidden channels
NUM_CLASSES = 4
H_POOL, W_POOL = BASE // 2, BASE // 2

MEAN = np.array([0.485, 0.456, 0.406], np.float32)
STD = np.array([0.229, 0.224, 0.225], np.float32)


# ----------------------- glue: interpolation matrices -----------------------
def bilinear_matrix(in_size: int, out_size: int) -> np.ndarray:
    """PyTorch F.interpolate(mode='bilinear', align_corners=False) as a matrix."""
    A = np.zeros((out_size, in_size), dtype=np.float32)
    scale = in_size / out_size
    for i in range(out_size):
        src = scale * (i + 0.5) - 0.5
        if src < 0.0:
            src = 0.0
        i0 = int(np.floor(src))
        lam = src - i0
        i0c = min(i0, in_size - 1)
        i1c = min(i0 + 1, in_size - 1)
        A[i, i0c] += (1.0 - lam)
        A[i, i1c] += lam
    return A


def avgpool2_matrix(in_size: int) -> np.ndarray:
    """2x2 stride-2 average pool (one axis) as a matrix (in//2, in)."""
    out = in_size // 2
    P = np.zeros((out, in_size), dtype=np.float32)
    for i in range(out):
        P[i, 2 * i] = 0.5
        P[i, 2 * i + 1] = 0.5
    return P


# 1-D factors (also used by the pure-JAX reference).
_A1H = bilinear_matrix(H_IN, BASE)        # (16, 8)
_A1W = bilinear_matrix(W_IN, BASE)        # (16, 12)
_PH = avgpool2_matrix(BASE)               # (8, 16)
_PW = avgpool2_matrix(BASE)               # (8, 16)
_A2H = bilinear_matrix(H_POOL, H_OUT)     # (8, 8)
_A2W = bilinear_matrix(W_POOL, W_OUT)     # (16, 8)

# Combined 2-D spatial operators (Kronecker) acting on row-major flattened
# spatial dims:  y_flat = x_flat @ kron(A_h, A_w)^T.
_K1T = np.kron(_A1H, _A1W).T.astype(np.float32)   # (96, 256)  resize -> (16,16)
_PT = np.kron(_PH, _PW).T.astype(np.float32)      # (256, 64)  2x2 avg pool
_K2T = np.kron(_A2H, _A2W).T.astype(np.float32)   # (64, 128)  upsample -> (8,16)
# Fused pool+upsample operator (drops one serial dot in the kernel).
_M = (_PT @ _K2T).astype(np.float32)              # (256, 128)
# Exact propagation of a constant-per-plane bias through the upsample
# (column sums of K2T; == 1 up to float rounding).
_COLSUM2 = (np.ones((1, _K2T.shape[0]), np.float32) @ _K2T).astype(np.float32)  # (1, 128)


# ----------------------- the Pallas kernel -----------------------
def _e2e_kernel(x_ref, k1t_ref, w1_ref, m_ref, w2_ref, b2_ref, out_ref):
    # Stage 1: bilinear resize of all B*C_IN planes (plus a ones row that
    # carries the bias) to (BASE, BASE) in one matmul on flattened spatial
    # dims: (B*C_IN + 1, 96) @ (96, 256).
    pre = jnp.dot(x_ref[...], k1t_ref[...],
                  preferred_element_type=jnp.float32)              # (7, 256)

    # Stage 2: folded (normalize + 1x1 conv C_IN->C_MID + bias) as one
    # block-diagonal channel-mix matmul over the whole batch, then ReLU.
    h = jnp.maximum(jnp.dot(w1_ref[...], pre,
                            preferred_element_type=jnp.float32), 0.0)  # (16, 256)

    # Stage 3: fused (2x2 avg-pool + bilinear upsample) in one matmul, then
    # 1x1 conv C_MID->NUM_CLASSES (block-diag over batch) + exact folded bias.
    mid = jnp.dot(h, m_ref[...],
                  preferred_element_type=jnp.float32)              # (16, 128)
    up = jnp.dot(w2_ref[...], mid,
                 preferred_element_type=jnp.float32) + b2_ref[...]  # (8, 128)

    # Stage 4: per-batch softmax over the class axis.  The per-column max over
    # all 8 rows is a valid per-group stabilization constant, so exp runs once
    # on the full (8,128) vreg; group sums are exact sublane reductions and the
    # normalization uses an exact divide (sum-to-1 correctness).
    m = jnp.max(up, axis=0, keepdims=True)                          # (1, 128)
    e = jnp.exp(up - m)                                             # (8, 128)
    d0 = jnp.sum(e[0:NUM_CLASSES, :], axis=0, keepdims=True)        # (1, 128)
    d1 = jnp.sum(e[NUM_CLASSES:2 * NUM_CLASSES, :], axis=0, keepdims=True)
    denom = jnp.concatenate(
        [jnp.broadcast_to(d0, (NUM_CLASSES, H_OUT * W_OUT)),
         jnp.broadcast_to(d1, (NUM_CLASSES, H_OUT * W_OUT))], axis=0)  # (8, 128)
    out_ref[...] = (e / denom).astype(out_ref.dtype)                # one full store


@jax.jit
def end_to_end_fast_scnn(x, w1, b1, w2, b2):
    """x: (B, C_IN, H_IN, W_IN) raw image in [0, 255]. Returns (B, K, H_OUT, W_OUT)."""
    mean = jnp.asarray(MEAN)
    std = jnp.asarray(STD)

    # Fold /255 and mean/std normalization into the first 1x1 conv (linear,
    # sits before the ReLU):  h = (w1/(255*std)) @ x_raw + (b1 - w1 @ (mean/std)).
    w1f = w1 * (1.0 / (255.0 * std))[None, :]          # (C_MID, C_IN)
    b1f = b1 - w1 @ (mean / std)                       # (C_MID,)

    # Block-diagonal channel-mix weights so the whole batch is one matmul;
    # bias b1 folded in as an extra column (pairs with the ones row of x_aug).
    eye_b = jnp.eye(B, dtype=jnp.float32)
    w1blk = jnp.kron(eye_b, w1f)                       # (B*C_MID, B*C_IN) = (16, 6)
    b1blk = jnp.tile(b1f, B).reshape(B * C_MID, 1)     # (16, 1)
    w1_aug = jnp.concatenate([w1blk, b1blk], axis=1)   # (16, 7)

    w2blk = jnp.kron(eye_b, w2)                        # (B*K, B*C_MID) = (8, 16)
    b2blk = jnp.tile(b2, B).reshape(B * NUM_CLASSES, 1)
    b2_up = b2blk * jnp.asarray(_COLSUM2)              # (8, 128) exact folded bias

    x_flat = x.reshape(B * C_IN, H_IN * W_IN)          # (6, 96)
    x_aug = jnp.concatenate(
        [x_flat, jnp.ones((1, H_IN * W_IN), jnp.float32)], axis=0)  # (7, 96)

    vmem = pl.BlockSpec(memory_space=pltpu.MemorySpace.VMEM)
    out = pl.pallas_call(
        _e2e_kernel,
        out_shape=jax.ShapeDtypeStruct((B * NUM_CLASSES, H_OUT * W_OUT),
                                       jnp.float32),
        in_specs=[vmem] * 6,
        out_specs=vmem,
    )(x_aug, jnp.asarray(_K1T), w1_aug, jnp.asarray(_M), w2blk, b2_up)

    return out.reshape(B, NUM_CLASSES, H_OUT, W_OUT)


# ----------------------- pure-JAX reference (original op order) -----------------------
def reference(x, w1, b1, w2, b2):
    a1h, a1w = jnp.asarray(_A1H), jnp.asarray(_A1W)
    ph, pw = jnp.asarray(_PH), jnp.asarray(_PW)
    a2h, a2w = jnp.asarray(_A2H), jnp.asarray(_A2W)
    mean, std = jnp.asarray(MEAN), jnp.asarray(STD)

    pre = jnp.einsum('oh,bchw->bcow', a1h, x)
    pre = jnp.einsum('ow,bchw->bcho', a1w, pre)
    pre = (pre / 255.0 - mean[None, :, None, None]) / std[None, :, None, None]
    h = jnp.einsum('mc,bchw->bmhw', w1, pre) + b1[None, :, None, None]
    h = jnp.maximum(h, 0.0)
    h = jnp.einsum('oh,bchw->bcow', ph, h)
    h = jnp.einsum('ow,bchw->bcho', pw, h)
    lo = jnp.einsum('km,bmhw->bkhw', w2, h) + b2[None, :, None, None]
    lo = jnp.einsum('oh,bkhw->bkow', a2h, lo)
    lo = jnp.einsum('ow,bkhw->bkho', a2w, lo)
    return jax.nn.softmax(lo, axis=1)


# ----------------------- main -----------------------
if __name__ == "__main__":
    key = jax.random.PRNGKey(0)
    k_x, k_w1, k_b1, k_w2, k_b2 = jax.random.split(key, 5)

    # Raw image in [0, 255] (the uint8 branch in PyTorch just casts to float).
    x = jax.random.uniform(k_x, (B, C_IN, H_IN, W_IN), jnp.float32,
                           minval=0.0, maxval=255.0)

    # Deterministic synthetic backbone parameters.
    w1 = 0.3 * jax.random.normal(k_w1, (C_MID, C_IN), jnp.float32)
    b1 = 0.1 * jax.random.normal(k_b1, (C_MID,), jnp.float32)
    w2 = 0.3 * jax.random.normal(k_w2, (NUM_CLASSES, C_MID), jnp.float32)
    b2 = 0.1 * jax.random.normal(k_b2, (NUM_CLASSES,), jnp.float32)

    out = jax.block_until_ready(end_to_end_fast_scnn(x, w1, b1, w2, b2))
    ref = jax.block_until_ready(reference(x, w1, b1, w2, b2))

    assert out.shape == (B, NUM_CLASSES, H_OUT, W_OUT), out.shape
    # Kronecker-fused path vs separable reference: only summation-order /
    # MXU-accumulation differences remain (all f32).
    np.testing.assert_allclose(np.asarray(out), np.asarray(ref),
                               rtol=5e-3, atol=1e-3)
    # Softmax sanity: channel-wise probabilities sum to 1 (exact divide now).
    np.testing.assert_allclose(np.asarray(out).sum(axis=1), 1.0, atol=1e-4)

    print("KERNEL_OK")
</pallas_src>

<mosaic_0001>
module attributes {stable_mosaic.version = 11 : i64} {
  func.func @_e2e_kernel(%arg0: memref<7x96xf32, #tpu.memory_space<vmem>>, %arg1: memref<96x256xf32, #tpu.memory_space<vmem>>, %arg2: memref<16x7xf32, #tpu.memory_space<vmem>>, %arg3: memref<256x128xf32, #tpu.memory_space<vmem>>, %arg4: memref<8x16xf32, #tpu.memory_space<vmem>>, %arg5: memref<8x128xf32, #tpu.memory_space<vmem>>, %arg6: memref<8x128xf32, #tpu.memory_space<vmem>>) attributes {dimension_semantics = [], scalar_prefetch = 0 : i64, scratch_operands = 0 : i64, tpu.core_type = #tpu.core_type<tc>} {
    %c0 = arith.constant 0 : index
    %c0_0 = arith.constant 0 : index
    %0 = vector.load %arg0[%c0, %c0_0] : memref<7x96xf32, #tpu.memory_space<vmem>>, vector<7x96xf32>
    %c0_1 = arith.constant 0 : index
    %c0_2 = arith.constant 0 : index
    %1 = vector.load %arg1[%c0_1, %c0_2] : memref<96x256xf32, #tpu.memory_space<vmem>>, vector<96x256xf32>
    %cst = arith.constant dense<0.000000e+00> : vector<7x256xf32>
    %2 = tpu.matmul %0, %1, %cst {dimension_numbers = #tpu.dot_dimension_numbers<[1], [0], [0], [1], [0, 0, 1, 1], [], []>} : vector<7x96xf32>, vector<96x256xf32>, vector<7x256xf32> -> vector<7x256xf32>
    %c0_3 = arith.constant 0 : index
    %c0_4 = arith.constant 0 : index
    %3 = vector.load %arg2[%c0_3, %c0_4] : memref<16x7xf32, #tpu.memory_space<vmem>>, vector<16x7xf32>
    %cst_5 = arith.constant dense<0.000000e+00> : vector<16x256xf32>
    %4 = tpu.matmul %3, %2, %cst_5 {dimension_numbers = #tpu.dot_dimension_numbers<[1], [0], [0], [1], [0, 0, 1, 1], [], []>} : vector<16x7xf32>, vector<7x256xf32>, vector<16x256xf32> -> vector<16x256xf32>
    %cst_6 = arith.constant 0.000000e+00 : f32
    %5 = vector.broadcast %cst_6 : f32 to vector<16x256xf32>
    %6 = arith.maximumf %4, %5 : vector<16x256xf32>
    %c0_7 = arith.constant 0 : index
    %c0_8 = arith.constant 0 : index
    %7 = vector.load %arg3[%c0_7, %c0_8] : memref<256x128xf32, #tpu.memory_space<vmem>>, vector<256x128xf32>
    %cst_9 = arith.constant dense<0.000000e+00> : vector<16x128xf32>
    %8 = tpu.matmul %6, %7, %cst_9 {dimension_numbers = #tpu.dot_dimension_numbers<[1], [0], [0], [1], [0, 0, 1, 1], [], []>} : vector<16x256xf32>, vector<256x128xf32>, vector<16x128xf32> -> vector<16x128xf32>
    %c0_10 = arith.constant 0 : index
    %c0_11 = arith.constant 0 : index
    %9 = vector.load %arg4[%c0_10, %c0_11] : memref<8x16xf32, #tpu.memory_space<vmem>>, vector<8x16xf32>
    %cst_12 = arith.constant dense<0.000000e+00> : vector<8x128xf32>
    %10 = tpu.matmul %9, %8, %cst_12 {dimension_numbers = #tpu.dot_dimension_numbers<[1], [0], [0], [1], [0, 0, 1, 1], [], []>} : vector<8x16xf32>, vector<16x128xf32>, vector<8x128xf32> -> vector<8x128xf32>
    %c0_13 = arith.constant 0 : index
    %c0_14 = arith.constant 0 : index
    %11 = vector.load %arg5[%c0_13, %c0_14] : memref<8x128xf32, #tpu.memory_space<vmem>>, vector<8x128xf32>
    %12 = arith.addf %10, %11 : vector<8x128xf32>
    %cst_15 = arith.constant dense<0xFF800000> : vector<128xf32>
    %13 = vector.multi_reduction <maximumf>, %12, %cst_15 [0] : vector<8x128xf32> to vector<128xf32>
    %14 = vector.shape_cast %13 : vector<128xf32> to vector<1x128xf32>
    %15 = vector.broadcast %14 : vector<1x128xf32> to vector<8x128xf32>
    %16 = arith.subf %12, %15 : vector<8x128xf32>
    %17 = math.exp %16 : vector<8x128xf32>
    %18 = vector.extract_strided_slice %17 {offsets = [0, 0], sizes = [4, 128], strides = [1, 1]} : vector<8x128xf32> to vector<4x128xf32>
    %cst_16 = arith.constant dense<0.000000e+00> : vector<128xf32>
    %19 = vector.multi_reduction <add>, %18, %cst_16 [0] : vector<4x128xf32> to vector<128xf32>
    %20 = vector.shape_cast %19 : vector<128xf32> to vector<1x128xf32>
    %21 = vector.extract_strided_slice %17 {offsets = [4, 0], sizes = [4, 128], strides = [1, 1]} : vector<8x128xf32> to vector<4x128xf32>
    %cst_17 = arith.constant dense<0.000000e+00> : vector<128xf32>
    %22 = vector.multi_reduction <add>, %21, %cst_17 [0] : vector<4x128xf32> to vector<128xf32>
    %23 = vector.shape_cast %22 : vector<128xf32> to vector<1x128xf32>
    %24 = vector.shape_cast %20 : vector<1x128xf32> to vector<1x128xf32>
    %25 = vector.broadcast %24 : vector<1x128xf32> to vector<4x128xf32>
    %26 = vector.shape_cast %23 : vector<1x128xf32> to vector<1x128xf32>
    %27 = vector.broadcast %26 : vector<1x128xf32> to vector<4x128xf32>
    %28 = tpu.concatenate %25, %27 in 0 : vector<4x128xf32>, vector<4x128xf32> -> vector<8x128xf32>
    %29 = arith.divf %17, %28 : vector<8x128xf32>
    %c0_18 = arith.constant 0 : index
    %c0_19 = arith.constant 0 : index
    %30 = vector.load %arg6[%c0_18, %c0_19] : memref<8x128xf32, #tpu.memory_space<vmem>>, vector<8x128xf32>
    tpu.vector_store %arg6[%c0_18, %c0_19], %29 {strides = array<i32>} : memref<8x128xf32, #tpu.memory_space<vmem>>, vector<8x128xf32>,
    return
  }
}

</mosaic_0001>

<llo_original>
// kernel: mul.40
$region0: #{mul.40}
  %s0 = inlined_call_operand.vmem [shape: f32[2,4], index: 0, kind: input, shape index: {}]
  %s1 = inlined_call_operand.vmem [shape: f32[8], index: 1, kind: output, shape index: {}]
  $region1: #{mul.40} parent=0
    #allocation0 [shape = 'u8[4096]{0}', space=vmem, size = 0x1000, scoped, tag = 'scoped mem for output reshape']
    #allocation1 [shape = 'u8[4096]{0}', space=vmem, size = 0x1000, scoped, tag = 'scoped mem for input reshape']
    %s3 = sshll.u32 1, 2
    %s4 = ssub.s32 %s3, 1
    %v5 = vld [vmem:[%s0] sm:%s4]
    %6 = vst [vmem:[#allocation1] sm:%s4] %v5
    %v7 = vld [vmem:[#allocation1] sm:$0x1]
    %vm8 = vcmask 31744
    %9 = vst.msk [vmem:[#allocation0] sm:$0x1] %vm8, %v7
    %s10 = scalar_lea.vmem [#allocation1], 1
    %v11 = vld [vmem:[%s10] sm:$0x1]
    %12 = vrot.lane.b32.xlu0 %v11, 4
    %v13 = vpop.permute.xlu0 %12
    %vm14 = vcmask 64544
    %15 = vst.msk [vmem:[#allocation0] sm:$0x1] %vm14, %v13
    %s17 = sshll.u32 1, 1
    %s18 = ssub.s32 %s17, 1
    %v20 = vld [vmem:[#allocation0] sm:%s18]
    %s21 = sshll.u32 1, 1
    %s22 = ssub.s32 %s21, 1
    %23 = vst [vmem:[%s1] sm:%s22] %v20

// kernel: tile.18
$region0: #{tile.18}
  #allocation2 [shape = 's32[1]{0}', space=sflag, size = 0x4, scoped, tag = 'scoped memory for tile.18']
  %s0 = inlined_call_operand.hbm [shape: f32[4], index: 0, kind: input, shape index: {}]
  %s1 = inlined_call_operand.vmem [shape: f32[2,4], index: 1, kind: output, shape index: {}]
  $region1: #{tile.18} parent=0
    #allocation0 [shape = 'u8[512]{0}', space=vmem, size = 0x400, scoped, tag = 'operand span for operand 0']
    #allocation1 [shape = 's32[1]{0}', space=sflag, size = 0x4, scoped, tag = 'scoped memory for tile.18']
    %2 = vsyncpa [#allocation1], 0
    // Predicated region
    $region2: #{tile.18} parent=1 // pred_check
      _
    $region3: #{tile.18} parent=1 // pred_check_branch
      %4 = sbr.rel (0) target = $region5
    $region4: #{tile.18} parent=1 // pred_region
      %s6 = ssub.s32 16, 16
      %7 = vsyncadd [#allocation1], %s6
      %s9 = sshll.u32 [#allocation0], 4
      %s10 = int_to_ptr.vmem [resolvable:$true] %s9
      %12 = dma.hbm_to_vmem [thread:$0]  %s0, 16, %s10, [#allocation1]
    $region5: #{tile.18} parent=1 // pred_fallthru
      _
    // Predicated region
    $region6: #{tile.18} parent=1 // pred_check
      _
    $region7: #{tile.18} parent=1 // pred_check_branch
      %14 = sbr.rel (0) target = $region9
    $region8: #{tile.18} parent=1 // pred_region
      %15 = dma.done [#allocation1], 16
    $region9: #{tile.18} parent=1 // pred_fallthru
      _
    %v16 = vld [vmem:[#allocation0] ss:$0 sm:$0xff]
    %17 = vst [vmem:[%s1] sm:$0x3] %v16
    %18 = vsyncpa [#allocation1], 1

// kernel: tile.13
$region0: #{tile.13}
  #allocation0 [shape = 's32[1]{0}', space=sflag, size = 0x4, scoped, tag = 'scoped memory for tile.13']
  %s0 = inlined_call_operand.vmem [shape: f32[8], index: 0, kind: input, shape index: {}]
  %s1 = inlined_call_operand.vmem [shape: f32[2,8], index: 1, kind: output, shape index: {}]
  // Predicated region
  $region2: #{tile.13} parent=0 // pred_check
    _
  $region3: #{tile.13} parent=0 // pred_check_branch
    %3 = sbr.rel (0) target = $region5
  $region4: #{tile.13} parent=0 // pred_region
    _
  $region5: #{tile.13} parent=0 // pred_fallthru
    _
  %v4 = vld [vmem:[%s0] ss:$0 sm:$0xff]
  %5 = vst [vmem:[%s1] sm:$0x3] %v4

// kernel: sub.1
$region0: #{sub.1}
  #allocation2 [shape = 's32[1]{0}', space=sflag, size = 0x4, scoped, tag = 'scoped memory for sub.1']
  %s0 = inlined_call_operand.hbm [shape: f32[8], index: 0, kind: input, shape index: {}]
  %s1 = inlined_call_operand.vmem [shape: f32[8], index: 1, kind: input, shape index: {}]
  %s2 = inlined_call_operand.vmem [shape: f32[8], index: 2, kind: output, shape index: {}]
  $region1: #{sub.1} parent=0
    #allocation0 [shape = 'u8[512]{0}', space=vmem, size = 0x400, scoped, tag = 'operand span for operand 0']
    #allocation1 [shape = 's32[1]{0}', space=sflag, size = 0x4, scoped, tag = 'scoped memory for sub.1']
    %3 = vsyncpa [#allocation1], 0
    %s5 = ssub.s32 16, 16
    %6 = vsyncadd [#allocation1], %s5
    %s8 = sshll.u32 [#allocation0], 4
    %s9 = int_to_ptr.vmem [resolvable:$true] %s8
    %11 = dma.hbm_to_vmem [thread:$0]  %s0, 16, %s9, [#allocation1]
    %12 = dma.done [#allocation1], 16
    %v13 = vld [vmem:[#allocation0] sm:$0x1]
    %v14 = vld [vmem:[%s1] sm:$0x1]
    %15 = xla_tuple %v13, %v14
    %16 = xla_tuple %15
    %v17 = vsub.f32 %v13, %v14
    %18 = xla_tuple %v17
    %19 = vst [vmem:[%s2] sm:$0x1] %v17
    %20 = vsyncpa [#allocation1], 1

// kernel: mul.41
$region0: #{mul.41}
  #allocation0 [shape = 's32[1]{0}', space=sflag, size = 0x4, scoped, tag = 'scoped memory for mul.41']
  %s0 = inlined_call_operand.vmem [shape: f32[8], index: 0, kind: input, shape index: {}]
  %s1 = inlined_call_operand.vmem [shape: f32[8,128], index: 1, kind: output, shape index: {}]
  // Predicated region
  $region2: #{mul.41} parent=0 // pred_check
    _
  $region3: #{mul.41} parent=0 // pred_check_branch
    %3 = sbr.rel (0) target = $region5
  $region4: #{mul.41} parent=0 // pred_region
    _
  $region5: #{mul.41} parent=0 // pred_fallthru
    _
  %v4 = vld [vmem:[%s0] ss:$0 sm:$0xff]
  %6 = vbcast.lane.b32.xlu0 %v4, 256
  %v7 = vpop.permute.xlu0 %6
  %8 = vst [vmem:[%s1] sm:$0xff] %v7

// kernel: tile.0
$region0: #{tile.0}
  %s0 = inlined_call_operand.vmem [shape: f32[2,8], index: 0, kind: input, shape index: {}]
  %s1 = inlined_call_operand.vmem [shape: f32[16,1], index: 1, kind: output, shape index: {}]
  $region1: #{tile.0} parent=0
    #allocation0 [shape = 'u8[4096]{0}', space=vmem, size = 0x1000, scoped, tag = 'scoped mem for input reshape']
    %s3 = sshll.u32 1, 2
    %s4 = ssub.s32 %s3, 1
    %v5 = vld [vmem:[%s0] sm:%s4]
    %6 = vst [vmem:[#allocation0] sm:%s4] %v5
    %v7 = vld [vmem:[#allocation0] sm:$0x3]
    %vm8 = vcmask 7168
    %9 = vst.msk [vmem:[%s1] ss:$8 sm:$0x3] %vm8, %v7
    %v10 = vld [vmem:[#allocation0] sm:$0x3]
    %11 = vrot.lane.b32.xlu0 %v10, 127
    %v12 = vpop.permute.xlu0 %11
    %vm13 = vcmask 7168
    %s14 = scalar_lea.vmem %s1, 1
    %15 = vst.msk [vmem:[%s14] ss:$8 sm:$0x3] %vm13, %v12
    %v16 = vld [vmem:[#allocation0] sm:$0x3]
    %17 = vrot.lane.b32.xlu0 %v16, 126
    %v18 = vpop.permute.xlu0 %17
    %vm19 = vcmask 7168
    %s20 = scalar_lea.vmem %s1, 2
    %21 = vst.msk [vmem:[%s20] ss:$8 sm:$0x3] %vm19, %v18
    %v22 = vld [vmem:[#allocation0] sm:$0x3]
    %23 = vrot.lane.b32.xlu0 %v22, 125
    %v24 = vpop.permute.xlu0 %23
    %vm25 = vcmask 7168
    %s26 = scalar_lea.vmem %s1, 3
    %27 = vst.msk [vmem:[%s26] ss:$8 sm:$0x3] %vm25, %v24
    %v28 = vld [vmem:[#allocation0] sm:$0x3]
    %29 = vrot.lane.b32.xlu0 %v28, 124
    %v30 = vpop.permute.xlu0 %29
    %vm31 = vcmask 7168
    %s32 = scalar_lea.vmem %s1, 4
    %33 = vst.msk [vmem:[%s32] ss:$8 sm:$0x3] %vm31, %v30
    %v34 = vld [vmem:[#allocation0] sm:$0x3]
    %35 = vrot.lane.b32.xlu0 %v34, 123
    %v36 = vpop.permute.xlu0 %35
    %vm37 = vcmask 7168
    %s38 = scalar_lea.vmem %s1, 5
    %39 = vst.msk [vmem:[%s38] ss:$8 sm:$0x3] %vm37, %v36
    %v40 = vld [vmem:[#allocation0] sm:$0x3]
    %41 = vrot.lane.b32.xlu0 %v40, 122
    %v42 = vpop.permute.xlu0 %41
    %vm43 = vcmask 7168
    %s44 = scalar_lea.vmem %s1, 6
    %45 = vst.msk [vmem:[%s44] ss:$8 sm:$0x3] %vm43, %v42
    %v46 = vld [vmem:[#allocation0] sm:$0x3]
    %47 = vrot.lane.b32.xlu0 %v46, 121
    %v48 = vpop.permute.xlu0 %47
    %vm49 = vcmask 7168
    %s50 = scalar_lea.vmem %s1, 7
    %51 = vst.msk [vmem:[%s50] ss:$8 sm:$0x3] %vm49, %v48

// kernel: end_to_end_fast_scnn.1
$region0: #{end_to_end_fast_scnn.1}
  #allocation0 [shape = 'u32[]', space=smem, size = 0x4, offset = 0x4, fixed_abs, tag = 'smem constant byte address 0x4 - core index']
  #allocation1 [shape = 'u32[144,128]{1,0:T(1,128)}', space=vmem, size = 0x12000, scoped, tag = 'internal scratch']
  %s0 = inlined_call_operand.vmem [shape: f32[7,96], index: 0, kind: input, shape index: {}]
  %s1 = inlined_call_operand.hbm [shape: f32[96,256], index: 1, kind: input, shape index: {}]
  %s2 = inlined_call_operand.vmem [shape: f32[16,7], index: 2, kind: input, shape index: {}]
  %s3 = inlined_call_operand.vmem [shape: f32[256,128], index: 3, kind: input, shape index: {}]
  %s4 = inlined_call_operand.vmem [shape: f32[8,16], index: 4, kind: input, shape index: {}]
  %s5 = inlined_call_operand.vmem [shape: f32[8,128], index: 5, kind: input, shape index: {}]
  %s6 = inlined_call_operand.vmem [shape: f32[8,128], index: 6, kind: output, shape index: {}]
  %s7 = sld [smem:[#allocation0]]
  $region38: #{end_to_end_fast_scnn.1} parent=0
    _
  %s9 = ssub.s32 1, %s7
  %s10 = scalar_select 0, %s9, %s7
  $region1: #{end_to_end_fast_scnn.1} parent=0
    #allocation2 [shape = 'u8[98304]{0}', space=vmem, size = 0x18000, scoped, tag = 'input window, operand 1, single buffered']
    #allocation3 [shape = 's32[1]{0}', space=sflag, size = 0x4, scoped, tag = 'scoped memory for end_to_end_fast_scnn.1']
    %11 = vsyncpa [#allocation3], 0
    // Predicated region
    $region2: #{end_to_end_fast_scnn.1} parent=1 // pred_check
      _
    $region3: #{end_to_end_fast_scnn.1} parent=1 // pred_check_branch
      %13 = sbr.rel (0) target = $region5
    $region4: #{end_to_end_fast_scnn.1} parent=1 // pred_region
      _
    $region5: #{end_to_end_fast_scnn.1} parent=1 // pred_fallthru
      _
    // Predicated region
    $region6: #{end_to_end_fast_scnn.1} parent=1 // pred_check
      _
    $region7: #{end_to_end_fast_scnn.1} parent=1 // pred_check_branch
      %15 = sbr.rel (0) target = $region9
    $region8: #{end_to_end_fast_scnn.1} parent=1 // pred_region
      %s17 = ssub.s32 3072, 3072
      %18 = vsyncadd [#allocation3], %s17
      %s19 = sshll.u32 [#allocation2], 4
      %s20 = int_to_ptr.vmem [resolvable:$true] %s19
      %25 = dma.hbm_to_vmem [thread:$0]  %s1, 3072, %s20, [#allocation3], 256, 256, 16
    $region9: #{end_to_end_fast_scnn.1} parent=1 // pred_fallthru
      _
    // Predicated region
    $region10: #{end_to_end_fast_scnn.1} parent=1 // pred_check
      _
    $region11: #{end_to_end_fast_scnn.1} parent=1 // pred_check_branch
      %27 = sbr.rel (0) target = $region13
    $region12: #{end_to_end_fast_scnn.1} parent=1 // pred_region
      _
    $region13: #{end_to_end_fast_scnn.1} parent=1 // pred_fallthru
      _
    // Predicated region
    $region14: #{end_to_end_fast_scnn.1} parent=1 // pred_check
      _
    $region15: #{end_to_end_fast_scnn.1} parent=1 // pred_check_branch
      %29 = sbr.rel (0) target = $region17
    $region16: #{end_to_end_fast_scnn.1} parent=1 // pred_region
      _
    $region17: #{end_to_end_fast_scnn.1} parent=1 // pred_fallthru
      _
    // Predicated region
    $region18: #{end_to_end_fast_scnn.1} parent=1 // pred_check
      _
    $region19: #{end_to_end_fast_scnn.1} parent=1 // pred_check_branch
      %31 = sbr.rel (0) target = $region21
    $region20: #{end_to_end_fast_scnn.1} parent=1 // pred_region
      _
    $region21: #{end_to_end_fast_scnn.1} parent=1 // pred_fallthru
      _
    // Predicated region
    $region22: #{end_to_end_fast_scnn.1} parent=1 // pred_check
      _
    $region23: #{end_to_end_fast_scnn.1} parent=1 // pred_check_branch
      %33 = sbr.rel (0) target = $region25
    $region24: #{end_to_end_fast_scnn.1} parent=1 // pred_region
      _
    $region25: #{end_to_end_fast_scnn.1} parent=1 // pred_fallthru
      _
    // Predicated region
    $region26: #{end_to_end_fast_scnn.1} parent=1 // pred_check
      _
    $region27: #{end_to_end_fast_scnn.1} parent=1 // pred_check_branch
      %35 = sbr.rel (0) target = $region29
    $region28: #{end_to_end_fast_scnn.1} parent=1 // pred_region
      %36 = dma.done [#allocation3], 3072
    $region29: #{end_to_end_fast_scnn.1} parent=1 // pred_fallthru
      _
    %v37 = vld [vmem:[%s0] sm:$0x7f]
    %v38 = vld [vmem:[#allocation2] sm:$0xff]
    %v39 = vld [vmem:[#allocation2 + $0x8] sm:$0xff]
    %v40 = vld [vmem:[#allocation2 + $0x10] sm:$0xff]
    %v41 = vld [vmem:[#allocation2 + $0x18] sm:$0xff]
    %v42 = vld [vmem:[#allocation2 + $0x20] sm:$0xff]
    %v43 = vld [vmem:[#allocation2 + $0x28] sm:$0xff]
    %v44 = vld [vmem:[#allocation2 + $0x30] sm:$0xff]
    %v45 = vld [vmem:[#allocation2 + $0x38] sm:$0xff]
    %v46 = vld [vmem:[#allocation2 + $0x40] sm:$0xff]
    %v47 = vld [vmem:[#allocation2 + $0x48] sm:$0xff]
    %v48 = vld [vmem:[#allocation2 + $0x50] sm:$0xff]
    %v49 = vld [vmem:[#allocation2 + $0x58] sm:$0xff]
    %v50 = vld [vmem:[#allocation2 + $0x60] sm:$0xff]
    %v51 = vld [vmem:[#allocation2 + $0x68] sm:$0xff]
    %v52 = vld [vmem:[#allocation2 + $0x70] sm:$0xff]
    %v53 = vld [vmem:[#allocation2 + $0x78] sm:$0xff]
    %v54 = vld [vmem:[#allocation2 + $0x80] sm:$0xff]
    %v55 = vld [vmem:[#allocation2 + $0x88] sm:$0xff]
    %v56 = vld [vmem:[#allocation2 + $0x90] sm:$0xff]
    %v57 = vld [vmem:[#allocation2 + $0x98] sm:$0xff]
    %v58 = vld [vmem:[#allocation2 + $0xa0] sm:$0xff]
    %v59 = vld [vmem:[#allocation2 + $0xa8] sm:$0xff]
    %v60 = vld [vmem:[#allocation2 + $0xb0] sm:$0xff]
    %v61 = vld [vmem:[#allocation2 + $0xb8] sm:$0xff]
    %vm62 = vcmask 785408
    %v64 = vsel %vm62, %v37, 0
    %66 = vmatprep.subr.mxu0 0.0
    %67 = vmatpush1.msra.mxu0 0.0
    %68 = vmatprep.subr.mxu0 0.0
    %69 = vmatpush1.msra.mxu0 0.0
    %70 = vmatprep.subr.mxu0 0.0
    %71 = vmatpush1.msra.mxu0 0.0
    %72 = vmatprep.subr.mxu0 0.0
    %73 = vmatpush1.msra.mxu0 0.0
    %74 = vmatprep.subr.mxu0 %v61
    %75 = vmatpush1.msra.mxu0 %v60
    %76 = vmatprep.subr.mxu0 %v59
    %77 = vmatpush1.msra.mxu0 %v58
    %78 = vmatprep.subr.mxu0 %v57
    %79 = vmatpush1.msra.mxu0 %v56
    %80 = vmatprep.subr.mxu0 %v55
    %81 = vmatpush1.msra.mxu0 %v54
    %82 = vmatprep.subr.mxu0 %v53
    %83 = vmatpush1.msra.mxu0 %v52
    %84 = vmatprep.subr.mxu0 %v51
    %85 = vmatpush1.msra.mxu0 %v50
    %86 = vmatprep.subr.mxu0 %v49
    %87 = vmatpush1.msra.mxu0 %v48
    %88 = vmatprep.subr.mxu0 %v47
    %89 = vmatpush1.msra.mxu0 %v46
    %90 = vmatprep.subr.mxu0 %v45
    %91 = vmatpush1.msra.mxu0 %v44
    %92 = vmatprep.subr.mxu0 %v43
    %93 = vmatpush1.msra.mxu0 %v42
    %94 = vmatprep.subr.mxu0 %v41
    %95 = vmatpush1.msra.mxu0 %v40
    %96 = vmatprep.subr.mxu0 %v39
    %97 = vmatpush1.msra.mxu0 %v38
    %98 = vmatprep.subr.mxu0 0.0
    %99 = vmatpush2.msra.mxu0 0.0
    %100 = vmatprep.subr.mxu0 0.0
    %101 = vmatpush2.msra.mxu0 0.0
    %102 = vmatprep.subr.mxu0 0.0
    %103 = vmatpush2.msra.mxu0 0.0
    %104 = vmatprep.subr.mxu0 0.0
    %105 = vmatpush2.msra.mxu0 0.0
    %106 = vmatprep.subr.mxu0 0.0
    %107 = vmatpush2.msra.mxu0 0.0
    %108 = vmatprep.subr.mxu0 0.0
    %109 = vmatpush2.msra.mxu0 0.0
    %110 = vmatprep.subr.mxu0 0.0
    %111 = vmatpush2.msra.mxu0 0.0
    %112 = vmatprep.subr.mxu0 0.0
    %113 = vmatpush2.msra.mxu0 0.0
    %114 = vmatprep.subr.mxu0 0.0
    %115 = vmatpush2.msra.mxu0 0.0
    %116 = vmatprep.subr.mxu0 0.0
    %117 = vmatpush2.msra.mxu0 0.0
    %118 = vmatprep.subr.mxu0 0.0
    %119 = vmatpush2.msra.mxu0 0.0
    %120 = vmatprep.subr.mxu0 0.0
    %121 = vmatpush2.msra.mxu0 0.0
    %122 = vmatprep.subr.mxu0 0.0
    %123 = vmatpush2.msra.mxu0 0.0
    %124 = vmatprep.subr.mxu0 0.0
    %125 = vmatpush2.msra.mxu0 0.0
    %126 = vmatprep.subr.mxu0 0.0
    %127 = vmatpush2.msra.mxu0 0.0
    %128 = vmatprep.subr.mxu0 0.0
    %129 = vmatpush2.msra.mxu0 0.0
    %130 = vmatprep.mubr.f32.mxu0 0.0
    %131 = vmatmul.mubr.f32.gmra.mxu0 %v64
    %v132 = vpop.f32.mrf.mxu0
    %v133 = vadd.f32 0.0, %v132
    %v134 = vpop.f32.mrf.mxu0
    %v135 = vadd.f32 0.0, %v134
    %136 = vdwg.mxu0
    %v137 = vld [vmem:[%s2] sm:$0xff]
    %v138 = vld [vmem:[%s2 + $0x8] sm:$0xff]
    %vm139 = vcmask 56320
    %v141 = vsel %vm139, %v137, 0
    %v144 = vsel %vm139, %v138, 0
    %vm146 = vcmask 1046528
    %v148 = vsel %vm146, %v133, 0
    %v151 = vsel %vm146, %v135, 0
    %153 = vmatprep.subr.mxu0 0.0
    %154 = vmatpush1.msra.mxu0 0.0
    %155 = vmatprep.subr.mxu0 0.0
    %156 = vmatpush1.msra.mxu0 0.0
    %157 = vmatprep.subr.mxu0 0.0
    %158 = vmatpush1.msra.mxu0 0.0
    %159 = vmatprep.subr.mxu0 0.0
    %160 = vmatpush1.msra.mxu0 0.0
    %161 = vmatprep.subr.mxu0 0.0
    %162 = vmatpush1.msra.mxu0 0.0
    %163 = vmatprep.subr.mxu0 0.0
    %164 = vmatpush1.msra.mxu0 0.0
    %165 = vmatprep.subr.mxu0 0.0
    %166 = vmatpush1.msra.mxu0 0.0
    %167 = vmatprep.subr.mxu0 0.0
    %168 = vmatpush1.msra.mxu0 0.0
    %169 = vmatprep.subr.mxu0 0.0
    %170 = vmatpush1.msra.mxu0 0.0
    %171 = vmatprep.subr.mxu0 0.0
    %172 = vmatpush1.msra.mxu0 0.0
    %173 = vmatprep.subr.mxu0 0.0
    %174 = vmatpush1.msra.mxu0 0.0
    %175 = vmatprep.subr.mxu0 0.0
    %176 = vmatpush1.msra.mxu0 0.0
    %177 = vmatprep.subr.mxu0 0.0
    %178 = vmatpush1.msra.mxu0 0.0
    %179 = vmatprep.subr.mxu0 0.0
    %180 = vmatpush1.msra.mxu0 0.0
    %181 = vmatprep.subr.mxu0 0.0
    %182 = vmatpush1.msra.mxu0 0.0
    %183 = vmatprep.subr.mxu0 %v151
    %184 = vmatpush1.msra.mxu0 %v148
    %185 = vmatprep.subr.mxu0 0.0
    %186 = vmatpush2.msra.mxu0 0.0
    %187 = vmatprep.subr.mxu0 0.0
    %188 = vmatpush2.msra.mxu0 0.0
    %189 = vmatprep.subr.mxu0 0.0
    %190 = vmatpush2.msra.mxu0 0.0
    %191 = vmatprep.subr.mxu0 0.0
    %192 = vmatpush2.msra.mxu0 0.0
    %193 = vmatprep.subr.mxu0 0.0
    %194 = vmatpush2.msra.mxu0 0.0
    %195 = vmatprep.subr.mxu0 0.0
    %196 = vmatpush2.msra.mxu0 0.0
    %197 = vmatprep.subr.mxu0 0.0
    %198 = vmatpush2.msra.mxu0 0.0
    %199 = vmatprep.subr.mxu0 0.0
    %200 = vmatpush2.msra.mxu0 0.0
    %201 = vmatprep.subr.mxu0 0.0
    %202 = vmatpush2.msra.mxu0 0.0
    %203 = vmatprep.subr.mxu0 0.0
    %204 = vmatpush2.msra.mxu0 0.0
    %205 = vmatprep.subr.mxu0 0.0
    %206 = vmatpush2.msra.mxu0 0.0
    %207 = vmatprep.subr.mxu0 0.0
    %208 = vmatpush2.msra.mxu0 0.0
    %209 = vmatprep.subr.mxu0 0.0
    %210 = vmatpush2.msra.mxu0 0.0
    %211 = vmatprep.subr.mxu0 0.0
    %212 = vmatpush2.msra.mxu0 0.0
    %213 = vmatprep.subr.mxu0 0.0
    %214 = vmatpush2.msra.mxu0 0.0
    %215 = vmatprep.subr.mxu0 0.0
    %216 = vmatpush2.msra.mxu0 0.0
    %217 = vmatprep.mubr.f32.mxu0 0.0
    %218 = vmatmul.mubr.f32.gmra.mxu0 %v141
    %v219 = vpop.f32.mrf.mxu0
    %v220 = vadd.f32 0.0, %v219
    %v221 = vpop.f32.mrf.mxu0
    %v222 = vadd.f32 0.0, %v221
    %223 = vmatprep.mubr.f32.mxu0 0.0
    %224 = vmatmul.mubr.f32.gmra.mxu0 %v144
    %v225 = vpop.f32.mrf.mxu0
    %v226 = vadd.f32 0.0, %v225
    %v227 = vpop.f32.mrf.mxu0
    %v228 = vadd.f32 0.0, %v227
    %229 = vdwg.mxu0
    %v230 = vmax.f32 %v220, 0.0
    %v231 = vmax.f32 %v222, 0.0
    %v232 = vmax.f32 %v226, 0.0
    %v233 = vmax.f32 %v228, 0.0
    %v234 = vld [vmem:[%s3] sm:$0xff]
    %v235 = vld [vmem:[%s3 + $0x8] sm:$0xff]
    %v236 = vld [vmem:[%s3 + $0x10] sm:$0xff]
    %v237 = vld [vmem:[%s3 + $0x18] sm:$0xff]
    %v238 = vld [vmem:[%s3 + $0x20] sm:$0xff]
    %v239 = vld [vmem:[%s3 + $0x28] sm:$0xff]
    %v240 = vld [vmem:[%s3 + $0x30] sm:$0xff]
    %v241 = vld [vmem:[%s3 + $0x38] sm:$0xff]
    %v242 = vld [vmem:[%s3 + $0x40] sm:$0xff]
    %v243 = vld [vmem:[%s3 + $0x48] sm:$0xff]
    %v244 = vld [vmem:[%s3 + $0x50] sm:$0xff]
    %v245 = vld [vmem:[%s3 + $0x58] sm:$0xff]
    %v246 = vld [vmem:[%s3 + $0x60] sm:$0xff]
    %v247 = vld [vmem:[%s3 + $0x68] sm:$0xff]
    %v248 = vld [vmem:[%s3 + $0x70] sm:$0xff]
    %v249 = vld [vmem:[%s3 + $0x78] sm:$0xff]
    %v250 = vld [vmem:[%s3 + $0x80] sm:$0xff]
    %v251 = vld [vmem:[%s3 + $0x88] sm:$0xff]
    %v252 = vld [vmem:[%s3 + $0x90] sm:$0xff]
    %v253 = vld [vmem:[%s3 + $0x98] sm:$0xff]
    %v254 = vld [vmem:[%s3 + $0xa0] sm:$0xff]
    %v255 = vld [vmem:[%s3 + $0xa8] sm:$0xff]
    %v256 = vld [vmem:[%s3 + $0xb0] sm:$0xff]
    %v257 = vld [vmem:[%s3 + $0xb8] sm:$0xff]
    %v258 = vld [vmem:[%s3 + $0xc0] sm:$0xff]
    %v259 = vld [vmem:[%s3 + $0xc8] sm:$0xff]
    %v260 = vld [vmem:[%s3 + $0xd0] sm:$0xff]
    %v261 = vld [vmem:[%s3 + $0xd8] sm:$0xff]
    %v262 = vld [vmem:[%s3 + $0xe0] sm:$0xff]
    %v263 = vld [vmem:[%s3 + $0xe8] sm:$0xff]
    %v264 = vld [vmem:[%s3 + $0xf0] sm:$0xff]
    %v265 = vld [vmem:[%s3 + $0xf8] sm:$0xff]
    %266 = vmatprep.subr.mxu0 0.0
    %267 = vmatpush1.msra.mxu0 %v249
    %268 = vmatprep.subr.mxu0 0.0
    %269 = vmatpush1.msra.mxu0 %v248
    %270 = vmatprep.subr.mxu0 0.0
    %271 = vmatpush1.msra.mxu0 %v247
    %272 = vmatprep.subr.mxu0 0.0
    %273 = vmatpush1.msra.mxu0 %v246
    %274 = vmatprep.subr.mxu0 0.0
    %275 = vmatpush1.msra.mxu0 %v245
    %276 = vmatprep.subr.mxu0 0.0
    %277 = vmatpush1.msra.mxu0 %v244
    %278 = vmatprep.subr.mxu0 0.0
    %279 = vmatpush1.msra.mxu0 %v243
    %280 = vmatprep.subr.mxu0 0.0
    %281 = vmatpush1.msra.mxu0 %v242
    %282 = vmatprep.subr.mxu0 0.0
    %283 = vmatpush1.msra.mxu0 %v241
    %284 = vmatprep.subr.mxu0 0.0
    %285 = vmatpush1.msra.mxu0 %v240
    %286 = vmatprep.subr.mxu0 0.0
    %287 = vmatpush1.msra.mxu0 %v239
    %288 = vmatprep.subr.mxu0 0.0
    %289 = vmatpush1.msra.mxu0 %v238
    %290 = vmatprep.subr.mxu0 0.0
    %291 = vmatpush1.msra.mxu0 %v237
    %292 = vmatprep.subr.mxu0 0.0
    %293 = vmatpush1.msra.mxu0 %v236
    %294 = vmatprep.subr.mxu0 0.0
    %295 = vmatpush1.msra.mxu0 %v235
    %296 = vmatprep.subr.mxu0 0.0
    %297 = vmatpush1.msra.mxu0 %v234
    %298 = vmatprep.subr.mxu0 0.0
    %299 = vmatpush2.msra.mxu0 %v265
    %300 = vmatprep.subr.mxu0 0.0
    %301 = vmatpush2.msra.mxu0 %v264
    %302 = vmatprep.subr.mxu0 0.0
    %303 = vmatpush2.msra.mxu0 %v263
    %304 = vmatprep.subr.mxu0 0.0
    %305 = vmatpush2.msra.mxu0 %v262
    %306 = vmatprep.subr.mxu0 0.0
    %307 = vmatpush2.msra.mxu0 %v261
    %308 = vmatprep.subr.mxu0 0.0
    %309 = vmatpush2.msra.mxu0 %v260
    %310 = vmatprep.subr.mxu0 0.0
    %311 = vmatpush2.msra.mxu0 %v259
    %312 = vmatprep.subr.mxu0 0.0
    %313 = vmatpush2.msra.mxu0 %v258
    %314 = vmatprep.subr.mxu0 0.0
    %315 = vmatpush2.msra.mxu0 %v257
    %316 = vmatprep.subr.mxu0 0.0
    %317 = vmatpush2.msra.mxu0 %v256
    %318 = vmatprep.subr.mxu0 0.0
    %319 = vmatpush2.msra.mxu0 %v255
    %320 = vmatprep.subr.mxu0 0.0
    %321 = vmatpush2.msra.mxu0 %v254
    %322 = vmatprep.subr.mxu0 0.0
    %323 = vmatpush2.msra.mxu0 %v253
    %324 = vmatprep.subr.mxu0 0.0
    %325 = vmatpush2.msra.mxu0 %v252
    %326 = vmatprep.subr.mxu0 0.0
    %327 = vmatpush2.msra.mxu0 %v251
    %328 = vmatprep.subr.mxu0 0.0
    %329 = vmatpush2.msra.mxu0 %v250
    %330 = vmatprep.mubr.f32.mxu0 %v231
    %331 = vmatmul.mubr.f32.gmra.mxu0 %v230
    %v332 = vpop.f32.mrf.mxu0
    %v333 = vadd.f32 0.0, %v332
    %v334 = vpop.f32.mrf.mxu0
    %335 = vmatprep.mubr.f32.mxu0 %v233
    %336 = vmatmul.mubr.f32.gmra.mxu0 %v232
    %v337 = vpop.f32.mrf.mxu0
    %v338 = vadd.f32 0.0, %v337
    %v339 = vpop.f32.mrf.mxu0
    %340 = vdwg.mxu0
    %v341 = vld [vmem:[%s4] sm:$0xff]
    %v342 = vld [vmem:[%s5] sm:$0xff]
    %vm343 = vcmask 130048
    %v345 = vsel %vm343, %v341, 0
    %347 = vmatprep.subr.mxu0 0.0
    %348 = vmatpush1.msra.mxu0 0.0
    %349 = vmatprep.subr.mxu0 0.0
    %350 = vmatpush1.msra.mxu0 0.0
    %351 = vmatprep.subr.mxu0 0.0
    %352 = vmatpush1.msra.mxu0 0.0
    %353 = vmatprep.subr.mxu0 0.0
    %354 = vmatpush1.msra.mxu0 0.0
    %355 = vmatprep.subr.mxu0 0.0
    %356 = vmatpush1.msra.mxu0 0.0
    %357 = vmatprep.subr.mxu0 0.0
    %358 = vmatpush1.msra.mxu0 0.0
    %359 = vmatprep.subr.mxu0 0.0
    %360 = vmatpush1.msra.mxu0 0.0
    %361 = vmatprep.subr.mxu0 0.0
    %362 = vmatpush1.msra.mxu0 0.0
    %363 = vmatprep.subr.mxu0 0.0
    %364 = vmatpush1.msra.mxu0 0.0
    %365 = vmatprep.subr.mxu0 0.0
    %366 = vmatpush1.msra.mxu0 0.0
    %367 = vmatprep.subr.mxu0 0.0
    %368 = vmatpush1.msra.mxu0 0.0
    %369 = vmatprep.subr.mxu0 0.0
    %370 = vmatpush1.msra.mxu0 0.0
    %371 = vmatprep.subr.mxu0 0.0
    %372 = vmatpush1.msra.mxu0 0.0
    %373 = vmatprep.subr.mxu0 0.0
    %374 = vmatpush1.msra.mxu0 0.0
    %375 = vmatprep.subr.mxu0 0.0
    %376 = vmatpush1.msra.mxu0 %v338
    %377 = vmatprep.subr.mxu0 0.0
    %378 = vmatpush1.msra.mxu0 %v333
    %379 = vmatprep.subr.mxu0 0.0
    %380 = vmatpush2.msra.mxu0 0.0
    %381 = vmatprep.subr.mxu0 0.0
    %382 = vmatpush2.msra.mxu0 0.0
    %383 = vmatprep.subr.mxu0 0.0
    %384 = vmatpush2.msra.mxu0 0.0
    %385 = vmatprep.subr.mxu0 0.0
    %386 = vmatpush2.msra.mxu0 0.0
    %387 = vmatprep.subr.mxu0 0.0
    %388 = vmatpush2.msra.mxu0 0.0
    %389 = vmatprep.subr.mxu0 0.0
    %390 = vmatpush2.msra.mxu0 0.0
    %391 = vmatprep.subr.mxu0 0.0
    %392 = vmatpush2.msra.mxu0 0.0
    %393 = vmatprep.subr.mxu0 0.0
    %394 = vmatpush2.msra.mxu0 0.0
    %395 = vmatprep.subr.mxu0 0.0
    %396 = vmatpush2.msra.mxu0 0.0
    %397 = vmatprep.subr.mxu0 0.0
    %398 = vmatpush2.msra.mxu0 0.0
    %399 = vmatprep.subr.mxu0 0.0
    %400 = vmatpush2.msra.mxu0 0.0
    %401 = vmatprep.subr.mxu0 0.0
    %402 = vmatpush2.msra.mxu0 0.0
    %403 = vmatprep.subr.mxu0 0.0
    %404 = vmatpush2.msra.mxu0 0.0
    %405 = vmatprep.subr.mxu0 0.0
    %406 = vmatpush2.msra.mxu0 0.0
    %407 = vmatprep.subr.mxu0 0.0
    %408 = vmatpush2.msra.mxu0 0.0
    %409 = vmatprep.subr.mxu0 0.0
    %410 = vmatpush2.msra.mxu0 0.0
    %411 = vmatprep.mubr.f32.mxu0 0.0
    %412 = vmatmul.mubr.f32.gmra.mxu0 %v345
    %v413 = vpop.f32.mrf.mxu0
    %v414 = vadd.f32 %v342, %v413
    %v415 = vpop.f32.mrf.mxu0
    %416 = vdwg.mxu0
    %v417 = vrot.slane %v414, 4
    %v418 = vmax.f32 %v414, %v417
    %v419 = vrot.slane %v418, 2
    %v420 = vmax.f32 %v418, %v419
    %v421 = vrot.slane %v420, 1
    %v422 = vmax.f32 %v420, %v421
    %v423 = vsub.f32 %v414, %v422
    %v424 = vmul.f32 %v423, 1.442695
    %v425 = vpow.pop %v424
    %vm426 = vcmask 1043456
    %v427 = vsel %vm426, %v425, 0.0
    %v428 = vrot.slane %v427, 4
    %v429 = vadd.f32 %v427, %v428
    %v430 = vrot.slane %v429, 2
    %v431 = vadd.f32 %v429, %v430
    %v432 = vrot.slane %v431, 1
    %v433 = vadd.f32 %v431, %v432
    %v435 = vrot.slane %v425, 4
    %v437 = vsel %vm426, %v435, 0.0
    %v438 = vrot.slane %v437, 4
    %v439 = vadd.f32 %v437, %v438
    %v440 = vrot.slane %v439, 2
    %v441 = vadd.f32 %v439, %v440
    %v442 = vrot.slane %v441, 1
    %v443 = vadd.f32 %v441, %v442
    %v444 = vsel %vm426, %v433, %v443
    %v445 = vrcp.pop %v444
    %v446 = vmul.f32 %v425, %v445
    %447 = vst [vmem:[%s6] sm:$0xff] %v446
    // Predicated region
    $region30: #{end_to_end_fast_scnn.1} parent=1 // pred_check
      _
    $region31: #{end_to_end_fast_scnn.1} parent=1 // pred_check_branch
      %449 = sbr.rel (0) target = $region33
    $region32: #{end_to_end_fast_scnn.1} parent=1 // pred_region
      _
    $region33: #{end_to_end_fast_scnn.1} parent=1 // pred_fallthru
      _
    // Predicated region
    $region34: #{end_to_end_fast_scnn.1} parent=1 // pred_check
      _
    $region35: #{end_to_end_fast_scnn.1} parent=1 // pred_check_branch
      %451 = sbr.rel (0) target = $region37
    $region36: #{end_to_end_fast_scnn.1} parent=1 // pred_region
      _
    $region37: #{end_to_end_fast_scnn.1} parent=1 // pred_fallthru
      _
    %452 = vsyncpa [#allocation3], 1

</llo_original>
